<compile_context>
chip_gen: v6e
topology: v6e:2x2x1
jax: 0.10.0
libtpu: 0.0.40
codegen_flags: <defaults>
</compile_context>

<pallas_src>
import functools
import math

import jax
import jax.numpy as jnp
from jax.experimental import pallas as pl
from jax.experimental.pallas import tpu as pltpu

_LANE = 128
_SUBLANE = 8


def _round_up(x, m):
    return ((x + m - 1) // m) * m


def _actor_kernel(max_action, num_layers, *refs):
    # refs = (x_ref, w1, b1, w2, b2, ..., wL, bL, out_ref)
    x_ref = refs[0]
    out_ref = refs[-1]
    param_refs = refs[1:-1]

    h = x_ref[...]
    for i in range(num_layers):
        w = param_refs[2 * i][...]
        b = param_refs[2 * i + 1][...]
        h = jnp.dot(h, w, preferred_element_type=jnp.float32) + b
        if i < num_layers - 1:
            h = jnp.maximum(h, 0.0)          # nn.ReLU()
        else:
            h = jnp.tanh(h)                  # nn.Tanh()
    out_ref[...] = (max_action * h).astype(out_ref.dtype)   # self.max_action * net(state)


def _pad_params_lane_dense(weights, biases):
    """Zero-pad each layer's out_features (and the next layer's in_features)
    up to a multiple of 128 so all intermediate activations are full-lane vregs.

    Padded columns carry bias 0 -> ReLU(0) = 0, and the matching padded rows of
    the next W are zero, so the forward pass is numerically unchanged."""
    num_layers = len(weights)
    pw, pb = [], []
    prev_out_pad = weights[0].shape[0]      # state_dim: never padded (full-dim block)
    for i in range(num_layers):
        w, b = weights[i], biases[i]
        in_dim, out_dim = w.shape
        out_pad = _round_up(out_dim, _LANE)
        w = jnp.pad(w, ((0, prev_out_pad - in_dim), (0, out_pad - out_dim)))
        b = jnp.pad(b, ((0, 0), (0, out_pad - out_dim)))
        pw.append(w)
        pb.append(b)
        prev_out_pad = out_pad
    return pw, pb


def _choose_batch_tile(batch, *, max_tile=4096, single_tile_rows=2048):
    """Pick (tb, padded_batch) minimising padding waste and per-step overhead.

    - up to `single_tile_rows` rows: one right-sized tile, grid=(1,)
    - larger: at least 2 steps (so the "parallel" batch axis can shard across
      the two v7x TensorCores), tb capped at `max_tile` rows."""
    rows = _round_up(batch, _SUBLANE)
    if rows <= single_tile_rows:
        return rows, rows
    n_steps = max(2, -(-rows // max_tile))
    tb = _round_up(-(-batch // n_steps), _SUBLANE)
    padded_batch = _round_up(batch, tb)
    return tb, padded_batch


def actor_forward(state, weights, biases, max_action, *, min_pallas_batch=16):
    """Run the Actor MLP forward pass with a batch-tiled Pallas kernel.

    state:   (batch, state_dim) float32
    weights: list of (in_dim, out_dim) float32 arrays
    biases:  list of (1, out_dim) float32 arrays
    """
    num_layers = len(weights)
    batch, state_dim = state.shape
    action_dim = weights[-1].shape[1]

    # Tiny batches (single-env action selection) are pure launch latency for a
    # pallas_call; plain XLA wins there.
    if batch < min_pallas_batch:
        return actor_reference(state, weights, biases, max_action)

    # --- Lane-dense activations: pad every layer width to a multiple of 128.
    pweights, pbiases = _pad_params_lane_dense(weights, biases)
    out_pad = pweights[-1].shape[1]

    # --- Padding-aware batch tiling.
    tb, padded_batch = _choose_batch_tile(batch)
    state_p = state
    if padded_batch != batch:
        state_p = jnp.pad(state, ((0, padded_batch - batch), (0, 0)))

    params = []
    for w, b in zip(pweights, pbiases):
        params.extend([w, b])

    kernel = functools.partial(_actor_kernel, float(max_action), num_layers)
    grid = (padded_batch // tb,)

    # State is tiled along batch; weights/biases stay resident (constant index map).
    in_specs = [pl.BlockSpec((tb, state_dim), lambda i: (i, 0))]
    for p in params:
        in_specs.append(pl.BlockSpec(p.shape, lambda i: (0, 0)))
    out_specs = pl.BlockSpec((tb, out_pad), lambda i: (i, 0))

    # Advisory cost hint (these RL shapes are latency/overhead bound).
    dims = [state_dim] + [w.shape[1] for w in pweights]
    flops = sum(2 * padded_batch * dims[i] * dims[i + 1] for i in range(num_layers))
    bytes_accessed = (
        state_p.size * 4
        + sum(int(p.size) for p in params) * 4
        + padded_batch * out_pad * 4
    )
    cost = pl.CostEstimate(
        flops=flops,
        transcendentals=padded_batch * out_pad,
        bytes_accessed=bytes_accessed,
    )

    compiler_kwargs = dict(dimension_semantics=("parallel",))
    if tb >= 2048:
        # Double-buffered (tb, 128) f32 I/O tiles plus padded intermediates start
        # eating into the 16 MiB v5e scoped default at large tb; raise it.
        compiler_kwargs["vmem_limit_bytes"] = 64 * 1024 * 1024

    out = pl.pallas_call(
        kernel,
        out_shape=jax.ShapeDtypeStruct((padded_batch, out_pad), jnp.float32),
        grid=grid,
        in_specs=in_specs,
        out_specs=out_specs,
        compiler_params=pltpu.CompilerParams(**compiler_kwargs),
        cost_estimate=cost,
    )(state_p, *params)

    # TODO(synk): for multi-100k rollout batches, let the consumer read the padded
    # (batch, 128) buffer directly to avoid this extra slice copy / 32x writeback.
    return out[:batch, :action_dim]


def init_actor_params(key, state_dim, action_dim, hidden_dim, num_layers):
    """Deterministic PyTorch-style (uniform +/- 1/sqrt(fan_in)) init."""
    dims = [state_dim] + [hidden_dim] * (num_layers - 1) + [action_dim]
    weights, biases = [], []
    for i in range(num_layers):
        fan_in, fan_out = dims[i], dims[i + 1]
        bound = 1.0 / math.sqrt(fan_in)
        key, wk, bk = jax.random.split(key, 3)
        w = jax.random.uniform(wk, (fan_in, fan_out), jnp.float32, -bound, bound)
        b = jax.random.uniform(bk, (1, fan_out), jnp.float32, -bound, bound)
        weights.append(w)
        biases.append(b)
    return weights, biases


def actor_reference(state, weights, biases, max_action):
    """Pure-JAX reference of the same forward pass (verification + tiny-batch path)."""
    h = state
    n = len(weights)
    for i, (w, b) in enumerate(zip(weights, biases)):
        h = h @ w + b
        h = jnp.maximum(h, 0.0) if i < n - 1 else jnp.tanh(h)
    return max_action * h


if __name__ == "__main__":
    # Small, module-consistent shapes.
    batch = 2
    state_dim = 8
    action_dim = 4
    hidden_dim = 32
    num_layers = 3          # Linear+ReLU, Linear+ReLU, Linear+Tanh
    max_action = 2.0

    key = jax.random.PRNGKey(0)
    key, sk = jax.random.split(key)
    state = jax.random.normal(sk, (batch, state_dim), jnp.float32)

    weights, biases = init_actor_params(
        key, state_dim, action_dim, hidden_dim, num_layers
    )

    # Force the Pallas path even at batch=2 so the kernel itself is exercised.
    out = jax.block_until_ready(
        actor_forward(state, weights, biases, max_action, min_pallas_batch=0)
    )
    ref = actor_reference(state, weights, biases, max_action)
    assert out.shape == (batch, action_dim)
    assert jnp.allclose(out, ref, atol=1e-5, rtol=1e-5), "mismatch vs reference"

    # Medium batch: single right-sized tile (tb=304) with batch padding.
    key, sk2 = jax.random.split(key)
    mid_state = jax.random.normal(sk2, (300, state_dim), jnp.float32)
    mid_out = jax.block_until_ready(
        actor_forward(mid_state, weights, biases, max_action)
    )
    mid_ref = actor_reference(mid_state, weights, biases, max_action)
    assert mid_out.shape == (300, action_dim)
    assert jnp.allclose(mid_out, mid_ref, atol=1e-5, rtol=1e-5), "mid-batch mismatch"

    # Large batch: >=2 parallel grid steps (v7x megacore split path).
    key, sk3 = jax.random.split(key)
    big_state = jax.random.normal(sk3, (5000, state_dim), jnp.float32)
    big_out = jax.block_until_ready(
        actor_forward(big_state, weights, biases, max_action)
    )
    big_ref = actor_reference(big_state, weights, biases, max_action)
    assert big_out.shape == (5000, action_dim)
    assert jnp.allclose(big_out, big_ref, atol=1e-5, rtol=1e-5), "big-batch mismatch"

    # Tiny-batch XLA fallback path (default threshold) still agrees.
    tiny_out = jax.block_until_ready(
        actor_forward(state, weights, biases, max_action)
    )
    assert jnp.allclose(tiny_out, ref, atol=1e-5, rtol=1e-5), "fallback mismatch"

    print("KERNEL_OK")
</pallas_src>

<mosaic_0001>
module attributes {stable_mosaic.version = 11 : i64} {
  func.func @_actor_kernel(%arg0: i32, %arg1: memref<8x8xf32, #tpu.memory_space<vmem>>, %arg2: memref<8x128xf32, #tpu.memory_space<vmem>>, %arg3: memref<1x128xf32, #tpu.memory_space<vmem>>, %arg4: memref<128x128xf32, #tpu.memory_space<vmem>>, %arg5: memref<1x128xf32, #tpu.memory_space<vmem>>, %arg6: memref<128x128xf32, #tpu.memory_space<vmem>>, %arg7: memref<1x128xf32, #tpu.memory_space<vmem>>, %arg8: memref<8x128xf32, #tpu.memory_space<vmem>>) attributes {dimension_semantics = [#tpu.dimension_semantics<parallel>], iteration_bounds = array<i64: 1>, scalar_prefetch = 0 : i64, scratch_operands = 0 : i64, tpu.core_type = #tpu.core_type<tc>, window_params = [{transform_indices = @transform_0, window_bounds = array<i64: 8, 8>}, {pipeline_mode = #tpu.pipeline_mode<synchronous>, transform_indices = @transform_1, window_bounds = array<i64: 8, 128>}, {pipeline_mode = #tpu.pipeline_mode<synchronous>, transform_indices = @transform_2, window_bounds = array<i64: 1, 128>}, {pipeline_mode = #tpu.pipeline_mode<synchronous>, transform_indices = @transform_3, window_bounds = array<i64: 128, 128>}, {pipeline_mode = #tpu.pipeline_mode<synchronous>, transform_indices = @transform_4, window_bounds = array<i64: 1, 128>}, {pipeline_mode = #tpu.pipeline_mode<synchronous>, transform_indices = @transform_5, window_bounds = array<i64: 128, 128>}, {pipeline_mode = #tpu.pipeline_mode<synchronous>, transform_indices = @transform_6, window_bounds = array<i64: 1, 128>}, {transform_indices = @transform_7, window_bounds = array<i64: 8, 128>}]} {
    %c0 = arith.constant 0 : index
    %c0_0 = arith.constant 0 : index
    %0 = vector.load %arg1[%c0, %c0_0] : memref<8x8xf32, #tpu.memory_space<vmem>>, vector<8x8xf32>
    %c0_1 = arith.constant 0 : index
    %c0_2 = arith.constant 0 : index
    %1 = vector.load %arg2[%c0_1, %c0_2] : memref<8x128xf32, #tpu.memory_space<vmem>>, vector<8x128xf32>
    %c0_3 = arith.constant 0 : index
    %c0_4 = arith.constant 0 : index
    %2 = vector.load %arg3[%c0_3, %c0_4] : memref<1x128xf32, #tpu.memory_space<vmem>>, vector<1x128xf32>
    %cst = arith.constant dense<0.000000e+00> : vector<8x128xf32>
    %3 = tpu.matmul %0, %1, %cst {dimension_numbers = #tpu.dot_dimension_numbers<[1], [0], [0], [1], [0, 0, 1, 1], [], []>} : vector<8x8xf32>, vector<8x128xf32>, vector<8x128xf32> -> vector<8x128xf32>
    %4 = vector.broadcast %2 : vector<1x128xf32> to vector<8x128xf32>
    %5 = arith.addf %3, %4 : vector<8x128xf32>
    %cst_5 = arith.constant 0.000000e+00 : f32
    %6 = vector.broadcast %cst_5 : f32 to vector<8x128xf32>
    %7 = arith.maximumf %5, %6 : vector<8x128xf32>
    %c0_6 = arith.constant 0 : index
    %c0_7 = arith.constant 0 : index
    %8 = vector.load %arg4[%c0_6, %c0_7] : memref<128x128xf32, #tpu.memory_space<vmem>>, vector<128x128xf32>
    %c0_8 = arith.constant 0 : index
    %c0_9 = arith.constant 0 : index
    %9 = vector.load %arg5[%c0_8, %c0_9] : memref<1x128xf32, #tpu.memory_space<vmem>>, vector<1x128xf32>
    %cst_10 = arith.constant dense<0.000000e+00> : vector<8x128xf32>
    %10 = tpu.matmul %7, %8, %cst_10 {dimension_numbers = #tpu.dot_dimension_numbers<[1], [0], [0], [1], [0, 0, 1, 1], [], []>} : vector<8x128xf32>, vector<128x128xf32>, vector<8x128xf32> -> vector<8x128xf32>
    %11 = vector.broadcast %9 : vector<1x128xf32> to vector<8x128xf32>
    %12 = arith.addf %10, %11 : vector<8x128xf32>
    %cst_11 = arith.constant 0.000000e+00 : f32
    %13 = vector.broadcast %cst_11 : f32 to vector<8x128xf32>
    %14 = arith.maximumf %12, %13 : vector<8x128xf32>
    %c0_12 = arith.constant 0 : index
    %c0_13 = arith.constant 0 : index
    %15 = vector.load %arg6[%c0_12, %c0_13] : memref<128x128xf32, #tpu.memory_space<vmem>>, vector<128x128xf32>
    %c0_14 = arith.constant 0 : index
    %c0_15 = arith.constant 0 : index
    %16 = vector.load %arg7[%c0_14, %c0_15] : memref<1x128xf32, #tpu.memory_space<vmem>>, vector<1x128xf32>
    %cst_16 = arith.constant dense<0.000000e+00> : vector<8x128xf32>
    %17 = tpu.matmul %14, %15, %cst_16 {dimension_numbers = #tpu.dot_dimension_numbers<[1], [0], [0], [1], [0, 0, 1, 1], [], []>} : vector<8x128xf32>, vector<128x128xf32>, vector<8x128xf32> -> vector<8x128xf32>
    %18 = vector.broadcast %16 : vector<1x128xf32> to vector<8x128xf32>
    %19 = arith.addf %17, %18 : vector<8x128xf32>
    %20 = math.tanh %19 : vector<8x128xf32>
    %cst_17 = arith.constant 2.000000e+00 : f32
    %21 = vector.broadcast %cst_17 : f32 to vector<8x128xf32>
    %22 = arith.mulf %21, %20 : vector<8x128xf32>
    %c0_18 = arith.constant 0 : index
    %c0_19 = arith.constant 0 : index
    %23 = vector.load %arg8[%c0_18, %c0_19] : memref<8x128xf32, #tpu.memory_space<vmem>>, vector<8x128xf32>
    tpu.vector_store %arg8[%c0_18, %c0_19], %22 {strides = array<i32>} : memref<8x128xf32, #tpu.memory_space<vmem>>, vector<8x128xf32>,
    return
  }
  func.func @transform_0(%arg0: i32) -> (i32, i32) {
    %c0_i32 = arith.constant 0 : i32
    %c0_i32_0 = arith.constant 0 : i32
    return %arg0, %c0_i32 : i32, i32
  }
  func.func @transform_1(%arg0: i32) -> (i32, i32) {
    %c0_i32 = arith.constant 0 : i32
    %c0_i32_0 = arith.constant 0 : i32
    %c0_i32_1 = arith.constant 0 : i32
    return %c0_i32, %c0_i32_0 : i32, i32
  }
  func.func @transform_2(%arg0: i32) -> (i32, i32) {
    %c0_i32 = arith.constant 0 : i32
    %c0_i32_0 = arith.constant 0 : i32
    %c0_i32_1 = arith.constant 0 : i32
    return %c0_i32, %c0_i32_0 : i32, i32
  }
  func.func @transform_3(%arg0: i32) -> (i32, i32) {
    %c0_i32 = arith.constant 0 : i32
    %c0_i32_0 = arith.constant 0 : i32
    %c0_i32_1 = arith.constant 0 : i32
    return %c0_i32, %c0_i32_0 : i32, i32
  }
  func.func @transform_4(%arg0: i32) -> (i32, i32) {
    %c0_i32 = arith.constant 0 : i32
    %c0_i32_0 = arith.constant 0 : i32
    %c0_i32_1 = arith.constant 0 : i32
    return %c0_i32, %c0_i32_0 : i32, i32
  }
  func.func @transform_5(%arg0: i32) -> (i32, i32) {
    %c0_i32 = arith.constant 0 : i32
    %c0_i32_0 = arith.constant 0 : i32
    %c0_i32_1 = arith.constant 0 : i32
    return %c0_i32, %c0_i32_0 : i32, i32
  }
  func.func @transform_6(%arg0: i32) -> (i32, i32) {
    %c0_i32 = arith.constant 0 : i32
    %c0_i32_0 = arith.constant 0 : i32
    %c0_i32_1 = arith.constant 0 : i32
    return %c0_i32, %c0_i32_0 : i32, i32
  }
  func.func @transform_7(%arg0: i32) -> (i32, i32) {
    %c0_i32 = arith.constant 0 : i32
    %c0_i32_0 = arith.constant 0 : i32
    return %arg0, %c0_i32 : i32, i32
  }
}

</mosaic_0001>

<llo_original>
// kernel: tpu_custom_call.1
$region0: #{tpu_custom_call.1}
  #allocation0 [shape = 'u32[]', space=smem, size = 0x4, offset = 0x4, fixed_abs, tag = 'smem constant byte address 0x4 - core index']
  #allocation1 [shape = 'u32[144,128]{1,0:T(1,128)}', space=vmem, size = 0x12000, scoped, tag = 'internal scratch']
  %s0 = inlined_call_operand.hbm [shape: f32[8,8], index: 0, kind: input, shape index: {}]
  %s1 = inlined_call_operand.hbm [shape: f32[8,128], index: 1, kind: input, shape index: {}]
  %s2 = inlined_call_operand.vmem [shape: f32[1,128], index: 2, kind: input, shape index: {}]
  %s3 = inlined_call_operand.hbm [shape: f32[128,128], index: 3, kind: input, shape index: {}]
  %s4 = inlined_call_operand.vmem [shape: f32[1,128], index: 4, kind: input, shape index: {}]
  %s5 = inlined_call_operand.hbm [shape: f32[128,128], index: 5, kind: input, shape index: {}]
  %s6 = inlined_call_operand.vmem [shape: f32[1,128], index: 6, kind: input, shape index: {}]
  %s7 = inlined_call_operand.hbm [shape: f32[8,128], index: 7, kind: output, shape index: {}]
  %s8 = sld [smem:[#allocation0]]
  $region54: #{tpu_custom_call.1} parent=0
    _
  %s10 = ssub.s32 1, %s8
  %s11 = scalar_select 0, %s10, %s8
  $region1: #{tpu_custom_call.1} parent=0
    #allocation2 [shape = 'u8[4096]{0}', space=vmem, size = 0x1000, scoped, tag = 'input window, operand 0, single buffered']
    #allocation3 [shape = 's32[1]{0}', space=sflag, size = 0x4, scoped, tag = 'scoped memory for tpu_custom_call.1']
    #allocation4 [shape = 's32[1]{0}', space=sflag, size = 0x4, scoped, tag = 'scoped memory for tpu_custom_call.1']
    #allocation5 [shape = 'u8[4096]{0}', space=vmem, size = 0x1000, scoped, tag = 'input window, operand 1, single buffered']
    #allocation6 [shape = 's32[1]{0}', space=sflag, size = 0x4, scoped, tag = 'scoped memory for tpu_custom_call.1']
    #allocation7 [shape = 'u8[65536]{0}', space=vmem, size = 0x10000, scoped, tag = 'input window, operand 3, single buffered']
    #allocation8 [shape = 'u8[65536]{0}', space=vmem, size = 0x10000, scoped, tag = 'input window, operand 5, single buffered']
    #allocation9 [shape = 's32[1]{0}', space=sflag, size = 0x4, scoped, tag = 'scoped memory for tpu_custom_call.1']
    #allocation10 [shape = 'u8[4096]{0}', space=vmem, size = 0x1000, scoped, tag = 'output window, operand 0, single buffered']
    %12 = vsyncpa [#allocation3], 0
    %13 = vsyncpa [#allocation6], 0
    %14 = vsyncpa [#allocation9], 0
    %15 = vsyncpa [#allocation4], 0
    // Predicated region
    $region2: #{tpu_custom_call.1} parent=1 // pred_check
      _
    $region3: #{tpu_custom_call.1} parent=1 // pred_check_branch
      %17 = sbr.rel (0) target = $region5
    $region4: #{tpu_custom_call.1} parent=1 // pred_region
      %s19 = ssub.s32 128, 128
      %20 = vsyncadd [#allocation3], %s19
      %s22 = sshll.u32 [#allocation2], 4
      %s23 = int_to_ptr.vmem [resolvable:$true] %s22
      %25 = dma.hbm_to_vmem [thread:$0]  %s0, 128, %s23, [#allocation3]
    $region5: #{tpu_custom_call.1} parent=1 // pred_fallthru
      _
    // Predicated region
    $region6: #{tpu_custom_call.1} parent=1 // pred_check
      _
    $region7: #{tpu_custom_call.1} parent=1 // pred_check_branch
      %27 = sbr.rel (0) target = $region9
    $region8: #{tpu_custom_call.1} parent=1 // pred_region
      %s29 = ssub.s32 128, 128
      %30 = vsyncadd [#allocation6], %s29
      %s32 = sshll.u32 [#allocation5], 4
      %s33 = int_to_ptr.vmem [resolvable:$true] %s32
      %35 = dma.hbm_to_vmem [thread:$0]  %s1, 128, %s33, [#allocation6]
    $region9: #{tpu_custom_call.1} parent=1 // pred_fallthru
      _
    // Predicated region
    $region10: #{tpu_custom_call.1} parent=1 // pred_check
      _
    $region11: #{tpu_custom_call.1} parent=1 // pred_check_branch
      %37 = sbr.rel (0) target = $region13
    $region12: #{tpu_custom_call.1} parent=1 // pred_region
      _
    $region13: #{tpu_custom_call.1} parent=1 // pred_fallthru
      _
    // Predicated region
    $region14: #{tpu_custom_call.1} parent=1 // pred_check
      _
    $region15: #{tpu_custom_call.1} parent=1 // pred_check_branch
      %39 = sbr.rel (0) target = $region17
    $region16: #{tpu_custom_call.1} parent=1 // pred_region
      %s41 = ssub.s32 2048, 2048
      %42 = vsyncadd [#allocation6], %s41
      %s43 = sshll.u32 [#allocation7], 4
      %s44 = int_to_ptr.vmem [resolvable:$true] %s43
      %49 = dma.hbm_to_vmem [thread:$0]  %s3, 2048, %s44, [#allocation6], 128, 128, 8
    $region17: #{tpu_custom_call.1} parent=1 // pred_fallthru
      _
    // Predicated region
    $region18: #{tpu_custom_call.1} parent=1 // pred_check
      _
    $region19: #{tpu_custom_call.1} parent=1 // pred_check_branch
      %51 = sbr.rel (0) target = $region21
    $region20: #{tpu_custom_call.1} parent=1 // pred_region
      _
    $region21: #{tpu_custom_call.1} parent=1 // pred_fallthru
      _
    // Predicated region
    $region22: #{tpu_custom_call.1} parent=1 // pred_check
      _
    $region23: #{tpu_custom_call.1} parent=1 // pred_check_branch
      %53 = sbr.rel (0) target = $region25
    $region24: #{tpu_custom_call.1} parent=1 // pred_region
      %s55 = ssub.s32 2048, 2048
      %56 = vsyncadd [#allocation9], %s55
      %s57 = sshll.u32 [#allocation8], 4
      %s58 = int_to_ptr.vmem [resolvable:$true] %s57
      %63 = dma.hbm_to_vmem [thread:$0]  %s5, 2048, %s58, [#allocation9], 128, 128, 8
    $region25: #{tpu_custom_call.1} parent=1 // pred_fallthru
      _
    // Predicated region
    $region26: #{tpu_custom_call.1} parent=1 // pred_check
      _
    $region27: #{tpu_custom_call.1} parent=1 // pred_check_branch
      %65 = sbr.rel (0) target = $region29
    $region28: #{tpu_custom_call.1} parent=1 // pred_region
      _
    $region29: #{tpu_custom_call.1} parent=1 // pred_fallthru
      _
    // Predicated region
    $region30: #{tpu_custom_call.1} parent=1 // pred_check
      _
    $region31: #{tpu_custom_call.1} parent=1 // pred_check_branch
      %67 = sbr.rel (0) target = $region33
    $region32: #{tpu_custom_call.1} parent=1 // pred_region
      %68 = dma.done [#allocation3], 128
    $region33: #{tpu_custom_call.1} parent=1 // pred_fallthru
      _
    // Predicated region
    $region34: #{tpu_custom_call.1} parent=1 // pred_check
      _
    $region35: #{tpu_custom_call.1} parent=1 // pred_check_branch
      %70 = sbr.rel (0) target = $region37
    $region36: #{tpu_custom_call.1} parent=1 // pred_region
      %71 = dma.done [#allocation6], 128
    $region37: #{tpu_custom_call.1} parent=1 // pred_fallthru
      _
    // Predicated region
    $region38: #{tpu_custom_call.1} parent=1 // pred_check
      _
    $region39: #{tpu_custom_call.1} parent=1 // pred_check_branch
      %73 = sbr.rel (0) target = $region41
    $region40: #{tpu_custom_call.1} parent=1 // pred_region
      %74 = dma.done [#allocation6], 2048
    $region41: #{tpu_custom_call.1} parent=1 // pred_fallthru
      _
    // Predicated region
    $region42: #{tpu_custom_call.1} parent=1 // pred_check
      _
    $region43: #{tpu_custom_call.1} parent=1 // pred_check_branch
      %76 = sbr.rel (0) target = $region45
    $region44: #{tpu_custom_call.1} parent=1 // pred_region
      %77 = dma.done [#allocation9], 2048
    $region45: #{tpu_custom_call.1} parent=1 // pred_fallthru
      _
    %v78 = vld [vmem:[#allocation2] sm:$0xff]
    %v79 = vld [vmem:[#allocation5] sm:$0xff]
    %v80 = vld [vmem:[%s2] sm:$0x1]
    %v82 = vlaneseq
    %v83 = vshrl.u32 %v82, 7
    %v84 = vsub.s32 0, %v83
    %v85 = vrot.slane %v80, %v84
    %vm87 = vcmask 64512
    %v89 = vsel %vm87, %v78, 0
    %91 = vmatprep.subr.mxu0 0.0
    %92 = vmatpush1.msra.mxu0 0.0
    %93 = vmatprep.subr.mxu0 0.0
    %94 = vmatpush1.msra.mxu0 0.0
    %95 = vmatprep.subr.mxu0 0.0
    %96 = vmatpush1.msra.mxu0 0.0
    %97 = vmatprep.subr.mxu0 0.0
    %98 = vmatpush1.msra.mxu0 0.0
    %99 = vmatprep.subr.mxu0 0.0
    %100 = vmatpush1.msra.mxu0 0.0
    %101 = vmatprep.subr.mxu0 0.0
    %102 = vmatpush1.msra.mxu0 0.0
    %103 = vmatprep.subr.mxu0 0.0
    %104 = vmatpush1.msra.mxu0 0.0
    %105 = vmatprep.subr.mxu0 0.0
    %106 = vmatpush1.msra.mxu0 0.0
    %107 = vmatprep.subr.mxu0 0.0
    %108 = vmatpush1.msra.mxu0 0.0
    %109 = vmatprep.subr.mxu0 0.0
    %110 = vmatpush1.msra.mxu0 0.0
    %111 = vmatprep.subr.mxu0 0.0
    %112 = vmatpush1.msra.mxu0 0.0
    %113 = vmatprep.subr.mxu0 0.0
    %114 = vmatpush1.msra.mxu0 0.0
    %115 = vmatprep.subr.mxu0 0.0
    %116 = vmatpush1.msra.mxu0 0.0
    %117 = vmatprep.subr.mxu0 0.0
    %118 = vmatpush1.msra.mxu0 0.0
    %119 = vmatprep.subr.mxu0 0.0
    %120 = vmatpush1.msra.mxu0 0.0
    %121 = vmatprep.subr.mxu0 0.0
    %122 = vmatpush1.msra.mxu0 %v79
    %123 = vmatprep.subr.mxu0 0.0
    %124 = vmatpush2.msra.mxu0 0.0
    %125 = vmatprep.subr.mxu0 0.0
    %126 = vmatpush2.msra.mxu0 0.0
    %127 = vmatprep.subr.mxu0 0.0
    %128 = vmatpush2.msra.mxu0 0.0
    %129 = vmatprep.subr.mxu0 0.0
    %130 = vmatpush2.msra.mxu0 0.0
    %131 = vmatprep.subr.mxu0 0.0
    %132 = vmatpush2.msra.mxu0 0.0
    %133 = vmatprep.subr.mxu0 0.0
    %134 = vmatpush2.msra.mxu0 0.0
    %135 = vmatprep.subr.mxu0 0.0
    %136 = vmatpush2.msra.mxu0 0.0
    %137 = vmatprep.subr.mxu0 0.0
    %138 = vmatpush2.msra.mxu0 0.0
    %139 = vmatprep.subr.mxu0 0.0
    %140 = vmatpush2.msra.mxu0 0.0
    %141 = vmatprep.subr.mxu0 0.0
    %142 = vmatpush2.msra.mxu0 0.0
    %143 = vmatprep.subr.mxu0 0.0
    %144 = vmatpush2.msra.mxu0 0.0
    %145 = vmatprep.subr.mxu0 0.0
    %146 = vmatpush2.msra.mxu0 0.0
    %147 = vmatprep.subr.mxu0 0.0
    %148 = vmatpush2.msra.mxu0 0.0
    %149 = vmatprep.subr.mxu0 0.0
    %150 = vmatpush2.msra.mxu0 0.0
    %151 = vmatprep.subr.mxu0 0.0
    %152 = vmatpush2.msra.mxu0 0.0
    %153 = vmatprep.subr.mxu0 0.0
    %154 = vmatpush2.msra.mxu0 0.0
    %155 = vmatprep.mubr.f32.mxu0 0.0
    %156 = vmatmul.mubr.f32.gmra.mxu0 %v89
    %v157 = vpop.f32.mrf.mxu0
    %v158 = vadd.f32 %v85, %v157
    %v159 = vpop.f32.mrf.mxu0
    %160 = vdwg.mxu0
    %v161 = vmax.f32 %v158, 0.0
    %v162 = vld [vmem:[#allocation7] sm:$0xff]
    %v163 = vld [vmem:[#allocation7 + $0x8] sm:$0xff]
    %v164 = vld [vmem:[#allocation7 + $0x10] sm:$0xff]
    %v165 = vld [vmem:[#allocation7 + $0x18] sm:$0xff]
    %v166 = vld [vmem:[#allocation7 + $0x20] sm:$0xff]
    %v167 = vld [vmem:[#allocation7 + $0x28] sm:$0xff]
    %v168 = vld [vmem:[#allocation7 + $0x30] sm:$0xff]
    %v169 = vld [vmem:[#allocation7 + $0x38] sm:$0xff]
    %v170 = vld [vmem:[#allocation7 + $0x40] sm:$0xff]
    %v171 = vld [vmem:[#allocation7 + $0x48] sm:$0xff]
    %v172 = vld [vmem:[#allocation7 + $0x50] sm:$0xff]
    %v173 = vld [vmem:[#allocation7 + $0x58] sm:$0xff]
    %v174 = vld [vmem:[#allocation7 + $0x60] sm:$0xff]
    %v175 = vld [vmem:[#allocation7 + $0x68] sm:$0xff]
    %v176 = vld [vmem:[#allocation7 + $0x70] sm:$0xff]
    %v177 = vld [vmem:[#allocation7 + $0x78] sm:$0xff]
    %v178 = vld [vmem:[%s4] sm:$0x1]
    %v180 = vlaneseq
    %v181 = vshrl.u32 %v180, 7
    %v182 = vsub.s32 0, %v181
    %v183 = vrot.slane %v178, %v182
    %185 = vmatprep.subr.mxu0 0.0
    %186 = vmatpush1.msra.mxu0 %v177
    %187 = vmatprep.subr.mxu0 0.0
    %188 = vmatpush1.msra.mxu0 %v176
    %189 = vmatprep.subr.mxu0 0.0
    %190 = vmatpush1.msra.mxu0 %v175
    %191 = vmatprep.subr.mxu0 0.0
    %192 = vmatpush1.msra.mxu0 %v174
    %193 = vmatprep.subr.mxu0 0.0
    %194 = vmatpush1.msra.mxu0 %v173
    %195 = vmatprep.subr.mxu0 0.0
    %196 = vmatpush1.msra.mxu0 %v172
    %197 = vmatprep.subr.mxu0 0.0
    %198 = vmatpush1.msra.mxu0 %v171
    %199 = vmatprep.subr.mxu0 0.0
    %200 = vmatpush1.msra.mxu0 %v170
    %201 = vmatprep.subr.mxu0 0.0
    %202 = vmatpush1.msra.mxu0 %v169
    %203 = vmatprep.subr.mxu0 0.0
    %204 = vmatpush1.msra.mxu0 %v168
    %205 = vmatprep.subr.mxu0 0.0
    %206 = vmatpush1.msra.mxu0 %v167
    %207 = vmatprep.subr.mxu0 0.0
    %208 = vmatpush1.msra.mxu0 %v166
    %209 = vmatprep.subr.mxu0 0.0
    %210 = vmatpush1.msra.mxu0 %v165
    %211 = vmatprep.subr.mxu0 0.0
    %212 = vmatpush1.msra.mxu0 %v164
    %213 = vmatprep.subr.mxu0 0.0
    %214 = vmatpush1.msra.mxu0 %v163
    %215 = vmatprep.subr.mxu0 0.0
    %216 = vmatpush1.msra.mxu0 %v162
    %217 = vmatprep.subr.mxu0 0.0
    %218 = vmatpush2.msra.mxu0 0.0
    %219 = vmatprep.subr.mxu0 0.0
    %220 = vmatpush2.msra.mxu0 0.0
    %221 = vmatprep.subr.mxu0 0.0
    %222 = vmatpush2.msra.mxu0 0.0
    %223 = vmatprep.subr.mxu0 0.0
    %224 = vmatpush2.msra.mxu0 0.0
    %225 = vmatprep.subr.mxu0 0.0
    %226 = vmatpush2.msra.mxu0 0.0
    %227 = vmatprep.subr.mxu0 0.0
    %228 = vmatpush2.msra.mxu0 0.0
    %229 = vmatprep.subr.mxu0 0.0
    %230 = vmatpush2.msra.mxu0 0.0
    %231 = vmatprep.subr.mxu0 0.0
    %232 = vmatpush2.msra.mxu0 0.0
    %233 = vmatprep.subr.mxu0 0.0
    %234 = vmatpush2.msra.mxu0 0.0
    %235 = vmatprep.subr.mxu0 0.0
    %236 = vmatpush2.msra.mxu0 0.0
    %237 = vmatprep.subr.mxu0 0.0
    %238 = vmatpush2.msra.mxu0 0.0
    %239 = vmatprep.subr.mxu0 0.0
    %240 = vmatpush2.msra.mxu0 0.0
    %241 = vmatprep.subr.mxu0 0.0
    %242 = vmatpush2.msra.mxu0 0.0
    %243 = vmatprep.subr.mxu0 0.0
    %244 = vmatpush2.msra.mxu0 0.0
    %245 = vmatprep.subr.mxu0 0.0
    %246 = vmatpush2.msra.mxu0 0.0
    %247 = vmatprep.subr.mxu0 0.0
    %248 = vmatpush2.msra.mxu0 0.0
    %249 = vmatprep.mubr.f32.mxu0 0.0
    %250 = vmatmul.mubr.f32.gmra.mxu0 %v161
    %v251 = vpop.f32.mrf.mxu0
    %v252 = vadd.f32 %v183, %v251
    %v253 = vpop.f32.mrf.mxu0
    %254 = vdwg.mxu0
    %v255 = vmax.f32 %v252, 0.0
    %v256 = vld [vmem:[#allocation8] sm:$0xff]
    %v257 = vld [vmem:[#allocation8 + $0x8] sm:$0xff]
    %v258 = vld [vmem:[#allocation8 + $0x10] sm:$0xff]
    %v259 = vld [vmem:[#allocation8 + $0x18] sm:$0xff]
    %v260 = vld [vmem:[#allocation8 + $0x20] sm:$0xff]
    %v261 = vld [vmem:[#allocation8 + $0x28] sm:$0xff]
    %v262 = vld [vmem:[#allocation8 + $0x30] sm:$0xff]
    %v263 = vld [vmem:[#allocation8 + $0x38] sm:$0xff]
    %v264 = vld [vmem:[#allocation8 + $0x40] sm:$0xff]
    %v265 = vld [vmem:[#allocation8 + $0x48] sm:$0xff]
    %v266 = vld [vmem:[#allocation8 + $0x50] sm:$0xff]
    %v267 = vld [vmem:[#allocation8 + $0x58] sm:$0xff]
    %v268 = vld [vmem:[#allocation8 + $0x60] sm:$0xff]
    %v269 = vld [vmem:[#allocation8 + $0x68] sm:$0xff]
    %v270 = vld [vmem:[#allocation8 + $0x70] sm:$0xff]
    %v271 = vld [vmem:[#allocation8 + $0x78] sm:$0xff]
    %v272 = vld [vmem:[%s6] sm:$0x1]
    %v274 = vlaneseq
    %v275 = vshrl.u32 %v274, 7
    %v276 = vsub.s32 0, %v275
    %v277 = vrot.slane %v272, %v276
    %279 = vmatprep.subr.mxu0 0.0
    %280 = vmatpush1.msra.mxu0 %v271
    %281 = vmatprep.subr.mxu0 0.0
    %282 = vmatpush1.msra.mxu0 %v270
    %283 = vmatprep.subr.mxu0 0.0
    %284 = vmatpush1.msra.mxu0 %v269
    %285 = vmatprep.subr.mxu0 0.0
    %286 = vmatpush1.msra.mxu0 %v268
    %287 = vmatprep.subr.mxu0 0.0
    %288 = vmatpush1.msra.mxu0 %v267
    %289 = vmatprep.subr.mxu0 0.0
    %290 = vmatpush1.msra.mxu0 %v266
    %291 = vmatprep.subr.mxu0 0.0
    %292 = vmatpush1.msra.mxu0 %v265
    %293 = vmatprep.subr.mxu0 0.0
    %294 = vmatpush1.msra.mxu0 %v264
    %295 = vmatprep.subr.mxu0 0.0
    %296 = vmatpush1.msra.mxu0 %v263
    %297 = vmatprep.subr.mxu0 0.0
    %298 = vmatpush1.msra.mxu0 %v262
    %299 = vmatprep.subr.mxu0 0.0
    %300 = vmatpush1.msra.mxu0 %v261
    %301 = vmatprep.subr.mxu0 0.0
    %302 = vmatpush1.msra.mxu0 %v260
    %303 = vmatprep.subr.mxu0 0.0
    %304 = vmatpush1.msra.mxu0 %v259
    %305 = vmatprep.subr.mxu0 0.0
    %306 = vmatpush1.msra.mxu0 %v258
    %307 = vmatprep.subr.mxu0 0.0
    %308 = vmatpush1.msra.mxu0 %v257
    %309 = vmatprep.subr.mxu0 0.0
    %310 = vmatpush1.msra.mxu0 %v256
    %311 = vmatprep.subr.mxu0 0.0
    %312 = vmatpush2.msra.mxu0 0.0
    %313 = vmatprep.subr.mxu0 0.0
    %314 = vmatpush2.msra.mxu0 0.0
    %315 = vmatprep.subr.mxu0 0.0
    %316 = vmatpush2.msra.mxu0 0.0
    %317 = vmatprep.subr.mxu0 0.0
    %318 = vmatpush2.msra.mxu0 0.0
    %319 = vmatprep.subr.mxu0 0.0
    %320 = vmatpush2.msra.mxu0 0.0
    %321 = vmatprep.subr.mxu0 0.0
    %322 = vmatpush2.msra.mxu0 0.0
    %323 = vmatprep.subr.mxu0 0.0
    %324 = vmatpush2.msra.mxu0 0.0
    %325 = vmatprep.subr.mxu0 0.0
    %326 = vmatpush2.msra.mxu0 0.0
    %327 = vmatprep.subr.mxu0 0.0
    %328 = vmatpush2.msra.mxu0 0.0
    %329 = vmatprep.subr.mxu0 0.0
    %330 = vmatpush2.msra.mxu0 0.0
    %331 = vmatprep.subr.mxu0 0.0
    %332 = vmatpush2.msra.mxu0 0.0
    %333 = vmatprep.subr.mxu0 0.0
    %334 = vmatpush2.msra.mxu0 0.0
    %335 = vmatprep.subr.mxu0 0.0
    %336 = vmatpush2.msra.mxu0 0.0
    %337 = vmatprep.subr.mxu0 0.0
    %338 = vmatpush2.msra.mxu0 0.0
    %339 = vmatprep.subr.mxu0 0.0
    %340 = vmatpush2.msra.mxu0 0.0
    %341 = vmatprep.subr.mxu0 0.0
    %342 = vmatpush2.msra.mxu0 0.0
    %343 = vmatprep.mubr.f32.mxu0 0.0
    %344 = vmatmul.mubr.f32.gmra.mxu0 %v255
    %v345 = vpop.f32.mrf.mxu0
    %v346 = vadd.f32 %v277, %v345
    %v347 = vpop.f32.mrf.mxu0
    %348 = vdwg.mxu0
    %v349 = vtanh.pop %v346
    %v350 = vmul.f32 %v349, 2.0
    %351 = vst [vmem:[#allocation10] sm:$0xff] %v350
    // Predicated region
    $region46: #{tpu_custom_call.1} parent=1 // pred_check
      _
    $region47: #{tpu_custom_call.1} parent=1 // pred_check_branch
      %353 = sbr.rel (0) target = $region49
    $region48: #{tpu_custom_call.1} parent=1 // pred_region
      %s355 = ssub.s32 128, 128
      %356 = vsyncadd [#allocation4], %s355
      %s358 = sshll.u32 [#allocation10], 4
      %s359 = int_to_ptr.vmem [resolvable:$true] %s358
      %361 = dma.vmem_to_hbm [thread:$0]  %s359, 128, %s7, [#allocation4]
    $region49: #{tpu_custom_call.1} parent=1 // pred_fallthru
      _
    // Predicated region
    $region50: #{tpu_custom_call.1} parent=1 // pred_check
      _
    $region51: #{tpu_custom_call.1} parent=1 // pred_check_branch
      %363 = sbr.rel (0) target = $region53
    $region52: #{tpu_custom_call.1} parent=1 // pred_region
      %364 = dma.done [#allocation4], 128
    $region53: #{tpu_custom_call.1} parent=1 // pred_fallthru
      _
    %365 = vsyncpa [#allocation3], 1
    %366 = vsyncpa [#allocation6], 1
    %367 = vsyncpa [#allocation9], 1
    %368 = vsyncpa [#allocation4], 1

</llo_original>
